<compile_context>
chip_gen: v7x
topology: tpu7x:2x2x1
jax: 0.10.0
libtpu: 0.0.40
codegen_flags: <defaults>
</compile_context>

<pallas_src>
import functools

import jax
import jax.numpy as jnp
from jax.experimental import pallas as pl
from jax.experimental.pallas import tpu as pltpu


def _round_up(x, m):
    return ((x + m - 1) // m) * m


def _pick_tile(dim, preferred, align):
    """Largest legal block size <= preferred (full dim if it already fits)."""
    if dim <= preferred:
        return dim                                    # full-dim block is always legal
    return max((preferred // align) * align, align)   # multiple of the layout align


def _pick_k_tile(f_pad, preferred):
    """Largest multiple of 128 that divides f_pad and is <= preferred."""
    if f_pad <= preferred:
        return f_pad
    best, d = 128, 128
    while d <= preferred:
        if f_pad % d == 0:
            best = d
        d += 128
    return best


def _linear_kernel(x_ref, wt_ref, b_ref, o_ref, acc_ref):
    # type='ori': one (TN, TB) tile of out = x @ W^T + b, K-tiled, f32 accumulator.
    k = pl.program_id(2)

    @pl.when(k == 0)
    def _():
        acc_ref[...] = jnp.zeros_like(acc_ref)

    acc_ref[...] += jnp.dot(x_ref[...].astype(jnp.bfloat16), wt_ref[...],
                            preferred_element_type=jnp.float32)

    @pl.when(k == pl.num_programs(2) - 1)
    def _():
        o_ref[...] = (acc_ref[...] + b_ref[...]).astype(o_ref.dtype)


def _linear_stats_kernel(x_ref, wt_ref, y_ref, sum_ref, sq_ref, acc_ref,
                         *, n_total, tn):
    # BN pass 1: y = x @ W^T (Linear bias cancels under BN mean subtraction),
    # plus per-feature sum / sum-of-squares accumulated across the N-tile sweep.
    # NOTE: one-pass E[y^2]-E[y]^2 variance; f32 accumulation, clamped at 0.
    i = pl.program_id(1)          # N-tile index  (inner, 'arbitrary')
    k = pl.program_id(2)          # K-tile index  (innermost, 'arbitrary')

    @pl.when(k == 0)
    def _():
        acc_ref[...] = jnp.zeros_like(acc_ref)

    @pl.when(jnp.logical_and(i == 0, k == 0))
    def _():
        sum_ref[...] = jnp.zeros_like(sum_ref)
        sq_ref[...] = jnp.zeros_like(sq_ref)

    acc_ref[...] += jnp.dot(x_ref[...].astype(jnp.bfloat16), wt_ref[...],
                            preferred_element_type=jnp.float32)

    @pl.when(k == pl.num_programs(2) - 1)
    def _():
        y = acc_ref[...]
        y_ref[...] = y
        if n_total % tn != 0:     # mask padded rows of the last partial N tile
            row = jax.lax.broadcasted_iota(jnp.int32, y.shape, 0) + i * tn
            y = jnp.where(row < n_total, y, 0.0)
        sum_ref[...] += jnp.sum(y, axis=0, keepdims=True)
        sq_ref[...] += jnp.sum(y * y, axis=0, keepdims=True)


def _affine_kernel(y_ref, a_ref, b_ref, o_ref):
    # BN pass 2: o = y * a + b  with  a = gamma * inv_std,  b = beta - mean * a.
    o_ref[...] = (y_ref[...] * a_ref[...] + b_ref[...]).astype(o_ref.dtype)


def feat_bottleneck_forward(x, weight_t, bias, bn_weight, bn_bias, *,
                            type="ori", eps=1e-5,
                            tile_n=512, tile_b=512, tile_k=2048):
    """Forward pass of feat_bootleneck.

    x:         (N, F)    float32
    weight_t:  (F_pad,B) bfloat16 -- Linear weight, pre-transposed, zero-padded
                                     along F to a multiple of 128 (see init_params)
    bias:      (B,)      float32
    bn_weight: (B,)      float32
    bn_bias:   (B,)      float32
    returns:   (N, B)    float32
    """
    N, F = x.shape
    Fp, B = weight_t.shape

    # Zero-pad x along F to match the padded weight (exact for a matmul).
    if F != Fp:
        x = jnp.pad(x, ((0, 0), (0, Fp - F)))
    x = x.astype(jnp.float32)     # bf16 cast happens inside the kernel, under the dot

    tb = _pick_tile(B, tile_b, 256 if B >= 256 else 128)   # lane-dense, MXU-wide
    tk = _pick_k_tile(Fp, tile_k)                          # divides Fp exactly
    gb, gk = pl.cdiv(B, tb), Fp // tk

    if type == "bn":
        # ---- Pass 1: tiled linear + per-feature sum / sum-of-squares ----
        tn1 = _pick_tile(N, min(tile_n, 256), 16)
        gn1 = pl.cdiv(N, tn1)
        y, s, q = pl.pallas_call(
            functools.partial(_linear_stats_kernel, n_total=N, tn=tn1),
            out_shape=(jax.ShapeDtypeStruct((N, B), jnp.float32),
                       jax.ShapeDtypeStruct((1, B), jnp.float32),
                       jax.ShapeDtypeStruct((1, B), jnp.float32)),
            grid_spec=pltpu.PrefetchScalarGridSpec(
                num_scalar_prefetch=0,
                # B outer (weight single HBM pass), N then K inner (accumulators).
                grid=(gb, gn1, gk),
                in_specs=[
                    pl.BlockSpec((tn1, tk), lambda j, i, k: (i, k)),
                    pl.BlockSpec((tk, tb), lambda j, i, k: (k, j)),
                ],
                out_specs=[
                    pl.BlockSpec((tn1, tb), lambda j, i, k: (i, j)),
                    pl.BlockSpec((1, tb), lambda j, i, k: (0, j)),
                    pl.BlockSpec((1, tb), lambda j, i, k: (0, j)),
                ],
                scratch_shapes=[pltpu.VMEM((tn1, tb), jnp.float32)],
            ),
            compiler_params=pltpu.CompilerParams(
                dimension_semantics=("parallel", "arbitrary", "arbitrary")),
        )(x, weight_t)

        # Per-feature affine coefficients: O(B) work -> plain JAX between the calls.
        # TODO(synk): BatchNorm1d running-mean/var tracking (eval mode) not
        #             implemented; this is the training-mode batch-stats forward.
        inv_n = 1.0 / N
        mean = s * inv_n
        var = jnp.maximum(q * inv_n - mean * mean, 0.0)   # biased variance, clamped
        a = bn_weight.reshape(1, B).astype(jnp.float32) * jax.lax.rsqrt(var + eps)
        b = bn_bias.reshape(1, B).astype(jnp.float32) - mean * a

        # ---- Pass 2: fused elementwise y*a + b ----
        tn2 = _pick_tile(N, tile_n, 8)
        gn2 = pl.cdiv(N, tn2)
        return pl.pallas_call(
            _affine_kernel,
            out_shape=jax.ShapeDtypeStruct((N, B), jnp.float32),
            grid_spec=pltpu.PrefetchScalarGridSpec(
                num_scalar_prefetch=0,
                grid=(gb, gn2),
                in_specs=[
                    pl.BlockSpec((tn2, tb), lambda j, i: (i, j)),
                    pl.BlockSpec((1, tb), lambda j, i: (0, j)),
                    pl.BlockSpec((1, tb), lambda j, i: (0, j)),
                ],
                out_specs=pl.BlockSpec((tn2, tb), lambda j, i: (i, j)),
            ),
            compiler_params=pltpu.CompilerParams(
                dimension_semantics=("parallel", "parallel")),
        )(y, a, b)

    # ---- type == 'ori': plain Linear ----
    tn = _pick_tile(N, tile_n, 16)
    gn = pl.cdiv(N, tn)
    return pl.pallas_call(
        _linear_kernel,
        out_shape=jax.ShapeDtypeStruct((N, B), jnp.float32),
        grid_spec=pltpu.PrefetchScalarGridSpec(
            num_scalar_prefetch=0,
            # B outer: weight & bias blocks constant across the inner N sweep
            # (single HBM pass over the weight); K innermost for the accumulator.
            grid=(gb, gn, gk),
            in_specs=[
                pl.BlockSpec((tn, tk), lambda j, i, k: (i, k)),
                pl.BlockSpec((tk, tb), lambda j, i, k: (k, j)),
                pl.BlockSpec((1, tb), lambda j, i, k: (0, j)),
            ],
            out_specs=pl.BlockSpec((tn, tb), lambda j, i, k: (i, j)),
            scratch_shapes=[pltpu.VMEM((tn, tb), jnp.float32)],
        ),
        compiler_params=pltpu.CompilerParams(
            dimension_semantics=("parallel", "parallel", "arbitrary")),
    )(x, weight_t, bias.reshape(1, B).astype(jnp.float32))


def init_params(key, feature_dim, bottleneck_dim):
    """Deterministic init matching the PyTorch init_weights recipe.

    The Linear weight is returned pre-transposed (F_pad, B), zero-padded along F
    to a multiple of 128 and cast to bf16 once (it is a static parameter); both
    transforms are exact for the matmul.
    """
    k_w, k_bn = jax.random.split(key)
    # xavier_normal_ on Linear.weight (out, in): std = sqrt(2/(fan_in+fan_out))
    std = (2.0 / (feature_dim + bottleneck_dim)) ** 0.5
    weight = std * jax.random.normal(k_w, (bottleneck_dim, feature_dim), jnp.float32)
    f_pad = _round_up(feature_dim, 128)
    weight_t = jnp.zeros((f_pad, bottleneck_dim), jnp.float32).at[:feature_dim].set(weight.T)
    weight_t = weight_t.astype(jnp.bfloat16)
    bias = jnp.zeros((bottleneck_dim,), jnp.float32)
    # BatchNorm1d: weight ~ N(1.0, 0.02), bias = 0
    bn_weight = 1.0 + 0.02 * jax.random.normal(k_bn, (bottleneck_dim,), jnp.float32)
    bn_bias = jnp.zeros((bottleneck_dim,), jnp.float32)
    return weight_t, bias, bn_weight, bn_bias


if __name__ == "__main__":
    feature_dim = 32
    bottleneck_dim = 256
    batch = 8

    key = jax.random.PRNGKey(0)
    k_x, k_p = jax.random.split(key)
    x = jax.random.normal(k_x, (batch, feature_dim), jnp.float32)
    weight_t, bias, bn_weight, bn_bias = init_params(k_p, feature_dim, bottleneck_dim)

    # Default module config: type='ori' -> forward is just the Linear layer.
    out_ori = feat_bottleneck_forward(x, weight_t, bias, bn_weight, bn_bias, type="ori")
    jax.block_until_ready(out_ori)

    # Also exercise the 'bn' branch (BatchNorm1d training-mode forward).
    out_bn = feat_bottleneck_forward(x, weight_t, bias, bn_weight, bn_bias, type="bn")
    jax.block_until_ready(out_bn)

    # Reference in plain JAX, using the same bf16-operand / f32-accum matmul semantics.
    w_ref = weight_t[:feature_dim, :]                     # (F, B) bf16, unpadded rows
    ref_lin = jnp.dot(x.astype(jnp.bfloat16), w_ref,
                      preferred_element_type=jnp.float32) + bias
    mean = ref_lin.mean(axis=0, keepdims=True)
    var = ref_lin.var(axis=0, keepdims=True)              # biased variance (N divisor)
    ref_bn = (ref_lin - mean) / jnp.sqrt(var + 1e-5) * bn_weight + bn_bias

    assert out_ori.shape == (batch, bottleneck_dim)
    assert out_bn.shape == (batch, bottleneck_dim)
    assert jnp.allclose(out_ori, ref_lin, atol=2e-3, rtol=2e-3)
    assert jnp.allclose(out_bn, ref_bn, atol=2e-3, rtol=2e-3)

    print("KERNEL_OK")
</pallas_src>

<mosaic_0001>
module attributes {stable_mosaic.version = 11 : i64} {
  func.func @_linear_kernel(%arg0: i32, %arg1: i32, %arg2: i32, %arg3: memref<8x128xf32, #tpu.memory_space<vmem>>, %arg4: memref<128x256xbf16, #tpu.memory_space<vmem>>, %arg5: memref<1x256xf32, #tpu.memory_space<vmem>>, %arg6: memref<8x256xf32, #tpu.memory_space<vmem>>, %arg7: memref<8x256xf32, #tpu.memory_space<vmem>>) attributes {dimension_semantics = [#tpu.dimension_semantics<parallel>, #tpu.dimension_semantics<parallel>, #tpu.dimension_semantics<arbitrary>], iteration_bounds = array<i64: 1, 1, 1>, scalar_prefetch = 0 : i64, scratch_operands = 1 : i64, tpu.core_type = #tpu.core_type<tc>, window_params = [{transform_indices = @transform_0, window_bounds = array<i64: 8, 128>}, {transform_indices = @transform_1, window_bounds = array<i64: 128, 256>}, {transform_indices = @transform_2, window_bounds = array<i64: 1, 256>}, {transform_indices = @transform_3, window_bounds = array<i64: 8, 256>}]} {
    %c0_i32 = arith.constant 0 : i32
    %0 = arith.cmpi eq, %arg2, %c0_i32 : i32
    %1 = arith.extui %0 : i1 to i32
    %c0_i32_0 = arith.constant 0 : i32
    %2 = arith.cmpi ne, %1, %c0_i32_0 : i32
    scf.if %2 {
      %cst_10 = arith.constant 0.000000e+00 : f32
      %13 = vector.broadcast %cst_10 : f32 to vector<8x256xf32>
      %c0_11 = arith.constant 0 : index
      %c0_12 = arith.constant 0 : index
      %14 = vector.load %arg7[%c0_11, %c0_12] : memref<8x256xf32, #tpu.memory_space<vmem>>, vector<8x256xf32>
      tpu.vector_store %arg7[%c0_11, %c0_12], %13 {strides = array<i32>} : memref<8x256xf32, #tpu.memory_space<vmem>>, vector<8x256xf32>,
    } else {
    }
    %c0 = arith.constant 0 : index
    %c0_1 = arith.constant 0 : index
    %3 = vector.load %arg7[%c0, %c0_1] : memref<8x256xf32, #tpu.memory_space<vmem>>, vector<8x256xf32>
    %c0_2 = arith.constant 0 : index
    %c0_3 = arith.constant 0 : index
    %4 = vector.load %arg3[%c0_2, %c0_3] : memref<8x128xf32, #tpu.memory_space<vmem>>, vector<8x128xf32>
    %5 = arith.truncf %4 : vector<8x128xf32> to vector<8x128xbf16>
    %c0_4 = arith.constant 0 : index
    %c0_5 = arith.constant 0 : index
    %6 = vector.load %arg4[%c0_4, %c0_5] : memref<128x256xbf16, #tpu.memory_space<vmem>>, vector<128x256xbf16>
    %cst = arith.constant dense<0.000000e+00> : vector<8x256xf32>
    %7 = tpu.matmul %5, %6, %cst {dimension_numbers = #tpu.dot_dimension_numbers<[1], [0], [0], [1], [0, 0, 1, 1], [], []>} : vector<8x128xbf16>, vector<128x256xbf16>, vector<8x256xf32> -> vector<8x256xf32>
    %8 = arith.addf %3, %7 : vector<8x256xf32>
    %c0_6 = arith.constant 0 : index
    %c0_7 = arith.constant 0 : index
    %9 = vector.load %arg7[%c0_6, %c0_7] : memref<8x256xf32, #tpu.memory_space<vmem>>, vector<8x256xf32>
    tpu.vector_store %arg7[%c0_6, %c0_7], %8 {strides = array<i32>} : memref<8x256xf32, #tpu.memory_space<vmem>>, vector<8x256xf32>,
    %c0_i32_8 = arith.constant 0 : i32
    %10 = arith.cmpi eq, %arg2, %c0_i32_8 : i32
    %11 = arith.extui %10 : i1 to i32
    %c0_i32_9 = arith.constant 0 : i32
    %12 = arith.cmpi ne, %11, %c0_i32_9 : i32
    scf.if %12 {
      %c0_10 = arith.constant 0 : index
      %c0_11 = arith.constant 0 : index
      %13 = vector.load %arg7[%c0_10, %c0_11] : memref<8x256xf32, #tpu.memory_space<vmem>>, vector<8x256xf32>
      %c0_12 = arith.constant 0 : index
      %c0_13 = arith.constant 0 : index
      %14 = vector.load %arg5[%c0_12, %c0_13] : memref<1x256xf32, #tpu.memory_space<vmem>>, vector<1x256xf32>
      %15 = vector.broadcast %14 : vector<1x256xf32> to vector<8x256xf32>
      %16 = arith.addf %13, %15 : vector<8x256xf32>
      %c0_14 = arith.constant 0 : index
      %c0_15 = arith.constant 0 : index
      %17 = vector.load %arg6[%c0_14, %c0_15] : memref<8x256xf32, #tpu.memory_space<vmem>>, vector<8x256xf32>
      tpu.vector_store %arg6[%c0_14, %c0_15], %16 {strides = array<i32>} : memref<8x256xf32, #tpu.memory_space<vmem>>, vector<8x256xf32>,
    } else {
    }
    return
  }
  func.func @transform_0(%arg0: i32, %arg1: i32, %arg2: i32) -> (i32, i32) {
    %c0_i32 = arith.constant 0 : i32
    return %arg1, %arg2 : i32, i32
  }
  func.func @transform_1(%arg0: i32, %arg1: i32, %arg2: i32) -> (i32, i32) {
    %c0_i32 = arith.constant 0 : i32
    return %arg2, %arg0 : i32, i32
  }
  func.func @transform_2(%arg0: i32, %arg1: i32, %arg2: i32) -> (i32, i32) {
    %c0_i32 = arith.constant 0 : i32
    %c0_i32_0 = arith.constant 0 : i32
    return %c0_i32, %arg0 : i32, i32
  }
  func.func @transform_3(%arg0: i32, %arg1: i32, %arg2: i32) -> (i32, i32) {
    %c0_i32 = arith.constant 0 : i32
    return %arg1, %arg0 : i32, i32
  }
}

</mosaic_0001>

<llo_original>
// kernel: tpu_custom_call.1
$region0: #{tpu_custom_call.1}
  #allocation0 [shape = 'u32[]', space=smem, size = 0x4, offset = 0x4, fixed_abs, tag = 'smem constant byte address 0x4 - core index']
  #allocation1 [shape = 'u32[144,128]{1,0:T(1,128)}', space=vmem, size = 0x12000, scoped, tag = 'internal scratch']
  #allocation2 [shape = 'f32[8,256]{1,0:T(8,128)}', space=vmem, size = 0x2000, scoped, tag = 'scratch operand']
  %s0 = inlined_call_operand.hbm [shape: f32[8,128], index: 0, kind: input, shape index: {}]
  %s1 = inlined_call_operand.hbm [shape: bf16[128,256], index: 1, kind: input, shape index: {}]
  %s2 = inlined_call_operand.vmem [shape: f32[1,256], index: 2, kind: input, shape index: {}]
  %s3 = inlined_call_operand.hbm [shape: f32[8,256], index: 3, kind: output, shape index: {}]
  %s4 = sld [smem:[#allocation0]]
  $region38: #{tpu_custom_call.1} parent=0
    _
  %s6 = ssub.s32 1, %s4
  %s7 = scalar_select 0, %s6, %s4
  $region1: #{tpu_custom_call.1} parent=0
    #allocation3 [shape = 'u8[4096]{0}', space=vmem, size = 0x1000, scoped, tag = 'input window, operand 0, single buffered']
    #allocation4 [shape = 's32[1]{0}', space=sflag, size = 0x4, scoped, tag = 'scoped memory for tpu_custom_call.1']
    #allocation5 [shape = 's32[1]{0}', space=sflag, size = 0x4, scoped, tag = 'scoped memory for tpu_custom_call.1']
    #allocation6 [shape = 'u8[65536]{0}', space=vmem, size = 0x10000, scoped, tag = 'input window, operand 1, single buffered']
    #allocation7 [shape = 's32[1]{0}', space=sflag, size = 0x4, scoped, tag = 'scoped memory for tpu_custom_call.1']
    #allocation8 [shape = 'u8[8192]{0}', space=vmem, size = 0x2000, scoped, tag = 'output window, operand 0, single buffered']
    %8 = vsyncpa [#allocation4], 0
    %9 = vsyncpa [#allocation7], 0
    %10 = vsyncpa [#allocation5], 0
    // Predicated region
    $region2: #{tpu_custom_call.1} parent=1 // pred_check
      _
    $region3: #{tpu_custom_call.1} parent=1 // pred_check_branch
      %12 = sbr.rel (0) target = $region5
    $region4: #{tpu_custom_call.1} parent=1 // pred_region
      %s14 = ssub.s32 128, 128
      %15 = vsyncadd [#allocation4], %s14
      %s17 = sshll.u32 [#allocation3], 4
      %s18 = int_to_ptr.vmem [resolvable:$true] %s17
      %20 = dma.hbm_to_vmem [thread:$0]  %s0, 128, %s18, [#allocation4]
    $region5: #{tpu_custom_call.1} parent=1 // pred_fallthru
      _
    // Predicated region
    $region6: #{tpu_custom_call.1} parent=1 // pred_check
      _
    $region7: #{tpu_custom_call.1} parent=1 // pred_check_branch
      %22 = sbr.rel (0) target = $region9
    $region8: #{tpu_custom_call.1} parent=1 // pred_region
      %s24 = ssub.s32 2048, 2048
      %25 = vsyncadd [#allocation7], %s24
      %s26 = sshll.u32 [#allocation6], 4
      %s27 = int_to_ptr.vmem [resolvable:$true] %s26
      %32 = dma.hbm_to_vmem [thread:$0]  %s1, 2048, %s27, [#allocation7], 128, 128, 8
    $region9: #{tpu_custom_call.1} parent=1 // pred_fallthru
      _
    // Predicated region
    $region10: #{tpu_custom_call.1} parent=1 // pred_check
      _
    $region11: #{tpu_custom_call.1} parent=1 // pred_check_branch
      %34 = sbr.rel (0) target = $region13
    $region12: #{tpu_custom_call.1} parent=1 // pred_region
      _
    $region13: #{tpu_custom_call.1} parent=1 // pred_fallthru
      _
    // Predicated region
    $region14: #{tpu_custom_call.1} parent=1 // pred_check
      _
    $region15: #{tpu_custom_call.1} parent=1 // pred_check_branch
      %36 = sbr.rel (0) target = $region17
    $region16: #{tpu_custom_call.1} parent=1 // pred_region
      %37 = dma.done [#allocation4], 128
    $region17: #{tpu_custom_call.1} parent=1 // pred_fallthru
      _
    // Predicated region
    $region18: #{tpu_custom_call.1} parent=1 // pred_check
      _
    $region19: #{tpu_custom_call.1} parent=1 // pred_check_branch
      %39 = sbr.rel (0) target = $region21
    $region20: #{tpu_custom_call.1} parent=1 // pred_region
      %40 = dma.done [#allocation7], 2048
    $region21: #{tpu_custom_call.1} parent=1 // pred_fallthru
      _
    %p42 = scmp.eq.s32.totalorder 0, 0
    // Predicated region
    $region22: #{tpu_custom_call.1} parent=1 // pred_check
      %p43 = pneg %p42
    $region23: #{tpu_custom_call.1} parent=1 // pred_check_branch
      %45 = sbr.rel (%p43) target = $region25
    $region24: #{tpu_custom_call.1} parent=1 // pred_region
      %46 = vst [vmem:[#allocation2] sm:$0xff] 0.0
      %47 = vst [vmem:[#allocation2 + $0x8] sm:$0xff] 0.0
    $region25: #{tpu_custom_call.1} parent=1 // pred_fallthru
      _
    %v48 = vld [vmem:[#allocation2] sm:$0xff]
    %v49 = vld [vmem:[#allocation2 + $0x8] sm:$0xff]
    %v50 = vld [vmem:[#allocation3] sm:$0xff]
    %v51 = vpack.c.bf16 %v50, %v50
    %v52 = vld [vmem:[#allocation6] sm:$0xff]
    %v53 = vld [vmem:[#allocation6 + $0x8] sm:$0xff]
    %v54 = vld [vmem:[#allocation6 + $0x10] sm:$0xff]
    %v55 = vld [vmem:[#allocation6 + $0x18] sm:$0xff]
    %v56 = vld [vmem:[#allocation6 + $0x20] sm:$0xff]
    %v57 = vld [vmem:[#allocation6 + $0x28] sm:$0xff]
    %v58 = vld [vmem:[#allocation6 + $0x30] sm:$0xff]
    %v59 = vld [vmem:[#allocation6 + $0x38] sm:$0xff]
    %v60 = vld [vmem:[#allocation6 + $0x40] sm:$0xff]
    %v61 = vld [vmem:[#allocation6 + $0x48] sm:$0xff]
    %v62 = vld [vmem:[#allocation6 + $0x50] sm:$0xff]
    %v63 = vld [vmem:[#allocation6 + $0x58] sm:$0xff]
    %v64 = vld [vmem:[#allocation6 + $0x60] sm:$0xff]
    %v65 = vld [vmem:[#allocation6 + $0x68] sm:$0xff]
    %v66 = vld [vmem:[#allocation6 + $0x70] sm:$0xff]
    %v67 = vld [vmem:[#allocation6 + $0x78] sm:$0xff]
    %v84 = vunpack.c.l.b16 %v52
    %v85 = vunpack.c.h.b16 %v52
    %v86 = vunpack.c.l.b16 %v53
    %v87 = vunpack.c.h.b16 %v53
    %v88 = vunpack.c.l.b16 %v54
    %v89 = vunpack.c.h.b16 %v54
    %v90 = vunpack.c.l.b16 %v55
    %v91 = vunpack.c.h.b16 %v55
    %v92 = vunpack.c.l.b16 %v56
    %v93 = vunpack.c.h.b16 %v56
    %v94 = vunpack.c.l.b16 %v57
    %v95 = vunpack.c.h.b16 %v57
    %v96 = vunpack.c.l.b16 %v58
    %v97 = vunpack.c.h.b16 %v58
    %v98 = vunpack.c.l.b16 %v59
    %v99 = vunpack.c.h.b16 %v59
    %v100 = vunpack.c.l.b16 %v60
    %v101 = vunpack.c.h.b16 %v60
    %v102 = vunpack.c.l.b16 %v61
    %v103 = vunpack.c.h.b16 %v61
    %v104 = vunpack.c.l.b16 %v62
    %v105 = vunpack.c.h.b16 %v62
    %v106 = vunpack.c.l.b16 %v63
    %v107 = vunpack.c.h.b16 %v63
    %v108 = vunpack.c.l.b16 %v64
    %v109 = vunpack.c.h.b16 %v64
    %v110 = vunpack.c.l.b16 %v65
    %v111 = vunpack.c.h.b16 %v65
    %v112 = vunpack.c.l.b16 %v66
    %v113 = vunpack.c.h.b16 %v66
    %v114 = vunpack.c.l.b16 %v67
    %v115 = vunpack.c.h.b16 %v67
    %v116 = vpack.c.b16 %v86, %v84
    %v117 = vpack.c.b16 %v87, %v85
    %v118 = vpack.c.b16 %v90, %v88
    %v119 = vpack.c.b16 %v91, %v89
    %v120 = vpack.c.b16 %v94, %v92
    %v121 = vpack.c.b16 %v95, %v93
    %v122 = vpack.c.b16 %v98, %v96
    %v123 = vpack.c.b16 %v99, %v97
    %v124 = vpack.c.b16 %v102, %v100
    %v125 = vpack.c.b16 %v103, %v101
    %v126 = vpack.c.b16 %v106, %v104
    %v127 = vpack.c.b16 %v107, %v105
    %v128 = vpack.c.b16 %v110, %v108
    %v129 = vpack.c.b16 %v111, %v109
    %v130 = vpack.c.b16 %v114, %v112
    %v131 = vpack.c.b16 %v115, %v113
    %148 = vmatprep.subr.bf16.mxu0 %v117
    %149 = vmatpush1.bf16.msra.mxu0 %v116
    %150 = vmatprep.subr.bf16.mxu0 %v119
    %151 = vmatpush1.bf16.msra.mxu0 %v118
    %152 = vmatprep.subr.bf16.mxu0 %v121
    %153 = vmatpush1.bf16.msra.mxu0 %v120
    %154 = vmatprep.subr.bf16.mxu0 %v123
    %155 = vmatpush1.bf16.msra.mxu0 %v122
    %156 = vmatprep.subr.bf16.mxu0 %v125
    %157 = vmatpush1.bf16.msra.mxu0 %v124
    %158 = vmatprep.subr.bf16.mxu0 %v127
    %159 = vmatpush1.bf16.msra.mxu0 %v126
    %160 = vmatprep.subr.bf16.mxu0 %v129
    %161 = vmatpush1.bf16.msra.mxu0 %v128
    %162 = vmatprep.subr.bf16.mxu0 %v131
    %163 = vmatpush1.bf16.msra.mxu0 %v130
    %164 = vmatprep.subr.bf16.mxu0 0
    %165 = vmatpush1.bf16.msra.mxu0 0
    %166 = vmatprep.subr.bf16.mxu0 0
    %167 = vmatpush1.bf16.msra.mxu0 0
    %168 = vmatprep.subr.bf16.mxu0 0
    %169 = vmatpush1.bf16.msra.mxu0 0
    %170 = vmatprep.subr.bf16.mxu0 0
    %171 = vmatpush1.bf16.msra.mxu0 0
    %172 = vmatprep.subr.bf16.mxu0 0
    %173 = vmatpush1.bf16.msra.mxu0 0
    %174 = vmatprep.subr.bf16.mxu0 0
    %175 = vmatpush1.bf16.msra.mxu0 0
    %176 = vmatprep.subr.bf16.mxu0 0
    %177 = vmatpush1.bf16.msra.mxu0 0
    %178 = vmatprep.subr.bf16.mxu0 0
    %179 = vmatpush1.bf16.msra.mxu0 0
    %180 = vmatprep.mubr.bf16.mxu0 0
    %181 = vmatmul.mubr.bf16.gmra.mrb[0].mxu0 %v51
    %v182 = vpop.f32.mrb[0].mxu0
    %v183 = vadd.f32 0.0, %v182
    %v184 = vpop.f32.mrb[0].mxu0
    %v185 = vadd.f32 0.0, %v184
    %v186 = vpop.f32.mrb[0].mxu0
    %v187 = vpop.f32.mrb[0].mxu0
    %188 = vdwg.mxu0
    %v189 = vadd.f32 %v48, %v183
    %v190 = vadd.f32 %v49, %v185
    %191 = vst [vmem:[#allocation2] sm:$0xff] %v189
    %192 = vst [vmem:[#allocation2 + $0x8] sm:$0xff] %v190
    // Predicated region
    $region26: #{tpu_custom_call.1} parent=1 // pred_check
      %p193 = pneg %p42
    $region27: #{tpu_custom_call.1} parent=1 // pred_check_branch
      %195 = sbr.rel (%p193) target = $region29
    $region28: #{tpu_custom_call.1} parent=1 // pred_region
      %v196 = vld [vmem:[#allocation2] sm:$0xff]
      %v197 = vld [vmem:[#allocation2 + $0x8] sm:$0xff]
      %v198 = vld [vmem:[%s2] sm:$0x3]
      %v200 = vlaneseq
      %v201 = vshrl.u32 %v200, 7
      %v202 = vsub.s32 0, %v201
      %v203 = vrot.slane %v198, %v202
      %v204 = vlaneseq
      %v205 = vshrl.u32 %v204, 7
      %v206 = vsub.s32 1, %v205
      %v207 = vrot.slane %v198, %v206
      %v210 = vadd.f32 %v196, %v203
      %v211 = vadd.f32 %v197, %v207
      %212 = vst [vmem:[#allocation8] sm:$0xff] %v210
      %213 = vst [vmem:[#allocation8 + $0x8] sm:$0xff] %v211
    $region29: #{tpu_custom_call.1} parent=1 // pred_fallthru
      _
    // Predicated region
    $region30: #{tpu_custom_call.1} parent=1 // pred_check
      _
    $region31: #{tpu_custom_call.1} parent=1 // pred_check_branch
      %215 = sbr.rel (0) target = $region33
    $region32: #{tpu_custom_call.1} parent=1 // pred_region
      %s217 = ssub.s32 256, 256
      %218 = vsyncadd [#allocation5], %s217
      %s220 = sshll.u32 [#allocation8], 4
      %s221 = int_to_ptr.vmem [resolvable:$true] %s220
      %223 = dma.vmem_to_hbm [thread:$0]  %s221, 256, %s3, [#allocation5]
    $region33: #{tpu_custom_call.1} parent=1 // pred_fallthru
      _
    // Predicated region
    $region34: #{tpu_custom_call.1} parent=1 // pred_check
      _
    $region35: #{tpu_custom_call.1} parent=1 // pred_check_branch
      %225 = sbr.rel (0) target = $region37
    $region36: #{tpu_custom_call.1} parent=1 // pred_region
      %226 = dma.done [#allocation5], 256
    $region37: #{tpu_custom_call.1} parent=1 // pred_fallthru
      _
    %227 = vsyncpa [#allocation4], 1
    %228 = vsyncpa [#allocation7], 1
    %229 = vsyncpa [#allocation5], 1

</llo_original>
